<compile_context>
chip_gen: v6e
topology: v6e:2x2x1
jax: 0.10.0
libtpu: 0.0.40
codegen_flags: <defaults>
</compile_context>

<pallas_src>
import jax
import jax.numpy as jnp
from jax.experimental import pallas as pl
from jax.experimental.pallas import tpu as pltpu

_NEG = -1e30                      # bias value for padded (fake) classes
_LANES = 128                      # TPU lane width; class dim padded to multiple
_VMEM_LIMIT = 32 * 1024 * 1024    # explicit scoped-VMEM limit (safe on v5e..v7x)
_IMG_TILE_BYTES = 4 * 1024 * 1024 # per-buffer image-tile budget (x2 double buffer)


# ----------------------------------------------------------------------------
# Kernels
# ----------------------------------------------------------------------------
def _vanilla_train_kernel(img_ref, w_ref, b_ref, tgt_ref, logits_ref, ce_ref):
    """One batch tile: pooled student forward + per-sample cross-entropy.

    img_ref    : (TB, C, HW)       VMEM  image tile (native dtype)
    w_ref      : (Kp, C)     f32   VMEM  fc weight, pre-scaled by 1/HW, zero-padded rows
    b_ref      : (1, Kp)     f32   VMEM  fc bias, padded classes set to -1e30
    tgt_ref    : (TB, 1)     i32   VMEM  class indices
    logits_ref : (TB, Kp)    f32   VMEM  out
    ce_ref     : (TB, 128)   f32   VMEM  out, per-sample CE broadcast across lanes
    """
    img = img_ref[...].astype(jnp.float32)     # upcast in-kernel (no extra HBM traffic)
    # Global average pool: the 1/HW scale is folded into w, so a spatial sum suffices.
    pooled = jnp.sum(img, axis=-1)             # (TB, C)
    # logits = pooled @ w.T + b  (contract on C via dimension_numbers; no wrapper transpose)
    logits = jax.lax.dot_general(
        pooled, w_ref[...],
        dimension_numbers=(((1,), (1,)), ((), ())),
        preferred_element_type=jnp.float32,
    ) + b_ref[...]                             # (TB, Kp)
    logits_ref[...] = logits

    # Cross-entropy with integer targets. Padded classes have bias=-1e30 so they
    # contribute exp(~-1e30)=0 to the LSE and never win the row max.
    m = jnp.max(logits, axis=-1, keepdims=True)                               # (TB, 1)
    lse = m + jnp.log(jnp.sum(jnp.exp(logits - m), axis=-1, keepdims=True))   # (TB, 1)

    tb, kp = logits.shape
    cls_ids = jax.lax.broadcasted_iota(jnp.int32, (tb, kp), 1)
    onehot = (cls_ids == tgt_ref[...]).astype(jnp.float32)                    # (TB, Kp)
    tgt_logit = jnp.sum(logits * onehot, axis=-1, keepdims=True)              # (TB, 1)

    per_sample = lse - tgt_logit                                              # (TB, 1)
    # Lane-dense (unmasked) store; the wrapper reads column 0 and averages over B.
    ce_ref[...] = jnp.broadcast_to(per_sample, ce_ref.shape)


def _vanilla_test_kernel(img_ref, w_ref, b_ref, logits_ref):
    """Student forward only (eval path: forward_test)."""
    img = img_ref[...].astype(jnp.float32)
    pooled = jnp.sum(img, axis=-1)
    logits_ref[...] = jax.lax.dot_general(
        pooled, w_ref[...],
        dimension_numbers=(((1,), (1,)), ((), ())),
        preferred_element_type=jnp.float32,
    ) + b_ref[...]


# ----------------------------------------------------------------------------
# Wrapper helpers
# ----------------------------------------------------------------------------
def _round_up(x, m):
    return ((x + m - 1) // m) * m


def _pick_batch_tile(b, per_sample_bytes, budget=_IMG_TILE_BYTES):
    """Largest divisor of b whose image tile fits the per-buffer budget,
    preferring multiples of 8 (sublane-aligned output tiles)."""
    tb_max = max(1, budget // max(per_sample_bytes, 1))
    if tb_max >= b:
        return b
    divisors = [d for d in range(1, b + 1) if b % d == 0 and d <= tb_max]
    aligned = [d for d in divisors if d % 8 == 0]
    return max(aligned) if aligned else max(divisors)


def _prep_params(fc_w, fc_b, hw):
    """Pad class dim up to a lane-dense multiple of 128 and fold 1/HW into W.

    Padded weight rows are zero; padded bias entries are -1e30 so padded logits
    are ~-1e30 and drop out of max/LSE (0 * -1e30 = -0.0, so no NaNs in the
    one-hot gather either).
    """
    k, c = fc_w.shape
    kp = _round_up(k, _LANES)
    w_scaled = fc_w.astype(jnp.float32) * (1.0 / float(hw))
    w_pad = jnp.zeros((kp, c), jnp.float32).at[:k, :].set(w_scaled)
    b_pad = jnp.full((1, kp), _NEG, jnp.float32).at[0, :k].set(fc_b.astype(jnp.float32))
    return w_pad, b_pad, kp


def _compiler_params():
    return pltpu.CompilerParams(
        dimension_semantics=("parallel",),    # batch axis -> both TCs on v7x
        vmem_limit_bytes=_VMEM_LIMIT,
    )


# ----------------------------------------------------------------------------
# Public wrappers (forward_train / forward_test semantics of Vanilla)
# ----------------------------------------------------------------------------
def vanilla_forward_train(image, target, fc_w, fc_b):
    """image: (B, C, H, W) NCHW, target: (B,) int. Returns (logits, {'ce': loss})."""
    B, C, H, W = image.shape
    K = fc_w.shape[0]
    HW = H * W
    img3d = image.reshape(B, C, HW)                 # free reshape; native dtype
    w_pad, b_pad, Kp = _prep_params(fc_w, fc_b, HW)
    tgt2d = target.reshape(B, 1).astype(jnp.int32)

    TB = _pick_batch_tile(B, C * HW * img3d.dtype.itemsize)
    grid = (B // TB,)

    logits_pad, ce_rows = pl.pallas_call(
        _vanilla_train_kernel,
        grid=grid,
        in_specs=[
            pl.BlockSpec((TB, C, HW), lambda i: (i, 0, 0)),   # image tile (pipelined)
            pl.BlockSpec((Kp, C), lambda i: (0, 0)),          # weights (resident)
            pl.BlockSpec((1, Kp), lambda i: (0, 0)),          # bias (resident)
            pl.BlockSpec((TB, 1), lambda i: (i, 0)),          # targets tile
        ],
        out_specs=(
            pl.BlockSpec((TB, Kp), lambda i: (i, 0)),         # lane-dense logits tile
            pl.BlockSpec((TB, _LANES), lambda i: (i, 0)),     # per-sample CE (lane-dense)
        ),
        out_shape=(
            jax.ShapeDtypeStruct((B, Kp), jnp.float32),
            jax.ShapeDtypeStruct((B, _LANES), jnp.float32),
        ),
        compiler_params=_compiler_params(),
    )(img3d, w_pad, b_pad, tgt2d)

    logits = logits_pad[:, :K]
    ce = jnp.mean(ce_rows[:, 0])     # mean over the *global* B, outside the kernel
    return logits, {"ce": ce}


def vanilla_forward_test(image, fc_w, fc_b):
    """Eval path: returns only the student logits."""
    B, C, H, W = image.shape
    K = fc_w.shape[0]
    HW = H * W
    img3d = image.reshape(B, C, HW)
    w_pad, b_pad, Kp = _prep_params(fc_w, fc_b, HW)

    TB = _pick_batch_tile(B, C * HW * img3d.dtype.itemsize)
    grid = (B // TB,)

    logits_pad = pl.pallas_call(
        _vanilla_test_kernel,
        grid=grid,
        in_specs=[
            pl.BlockSpec((TB, C, HW), lambda i: (i, 0, 0)),
            pl.BlockSpec((Kp, C), lambda i: (0, 0)),
            pl.BlockSpec((1, Kp), lambda i: (0, 0)),
        ],
        out_specs=pl.BlockSpec((TB, Kp), lambda i: (i, 0)),
        out_shape=jax.ShapeDtypeStruct((B, Kp), jnp.float32),
        compiler_params=_compiler_params(),
    )(img3d, w_pad, b_pad)
    return logits_pad[:, :K]


# TODO(synk): forward_cam references self.teacher / self.fc_s / self.fc_t which the
# Vanilla module never defines (dead code in the upstream repo); not implemented.


# ----------------------------------------------------------------------------
# Demo / correctness check
# ----------------------------------------------------------------------------
if __name__ == "__main__":
    key = jax.random.PRNGKey(0)
    k_img, k_w, k_b, k_t = jax.random.split(key, 4)

    B, C, H, W = 2, 4, 16, 16
    NUM_CLASSES = 10

    image = jax.random.normal(k_img, (B, C, H, W), dtype=jnp.float32)
    target = jax.random.randint(k_t, (B,), 0, NUM_CLASSES, dtype=jnp.int32)

    # Deterministic synthetic student parameters (fc: features C -> NUM_CLASSES)
    fc_w = jax.random.normal(k_w, (NUM_CLASSES, C), dtype=jnp.float32) * 0.1
    fc_b = jax.random.normal(k_b, (NUM_CLASSES,), dtype=jnp.float32) * 0.01

    logits, losses = vanilla_forward_train(image, target, fc_w, fc_b)
    logits = jax.block_until_ready(logits)
    ce = jax.block_until_ready(losses["ce"])

    logits_eval = jax.block_until_ready(vanilla_forward_test(image, fc_w, fc_b))

    # Pure-JAX reference check
    pooled_ref = jnp.mean(image.reshape(B, C, H * W), axis=-1)
    logits_ref = pooled_ref @ fc_w.T + fc_b
    lse_ref = jax.scipy.special.logsumexp(logits_ref, axis=-1)
    ce_ref = jnp.mean(
        lse_ref - jnp.take_along_axis(logits_ref, target[:, None], axis=1)[:, 0]
    )

    assert logits.shape == (B, NUM_CLASSES), "logits shape mismatch"
    assert jnp.allclose(logits, logits_ref, atol=1e-4), "logits mismatch"
    assert jnp.allclose(logits_eval, logits_ref, atol=1e-4), "eval logits mismatch"
    assert jnp.allclose(ce, ce_ref, atol=1e-4), "ce loss mismatch"

    print("KERNEL_OK")
</pallas_src>

<mosaic_0001>
module attributes {stable_mosaic.version = 11 : i64} {
  func.func @_vanilla_train_kernel(%arg0: i32, %arg1: memref<2x4x256xf32, #tpu.memory_space<vmem>>, %arg2: memref<128x4xf32, #tpu.memory_space<vmem>>, %arg3: memref<1x128xf32, #tpu.memory_space<vmem>>, %arg4: memref<2x1xi32, #tpu.memory_space<vmem>>, %arg5: memref<2x128xf32, #tpu.memory_space<vmem>>, %arg6: memref<2x128xf32, #tpu.memory_space<vmem>>) attributes {dimension_semantics = [#tpu.dimension_semantics<parallel>], iteration_bounds = array<i64: 1>, scalar_prefetch = 0 : i64, scratch_operands = 0 : i64, tpu.core_type = #tpu.core_type<tc>, window_params = [{transform_indices = @transform_0, window_bounds = array<i64: 2, 4, 256>}, {pipeline_mode = #tpu.pipeline_mode<synchronous>, transform_indices = @transform_1, window_bounds = array<i64: 128, 4>}, {pipeline_mode = #tpu.pipeline_mode<synchronous>, transform_indices = @transform_2, window_bounds = array<i64: 1, 128>}, {transform_indices = @transform_3, window_bounds = array<i64: 2, 1>}, {transform_indices = @transform_4, window_bounds = array<i64: 2, 128>}, {transform_indices = @transform_5, window_bounds = array<i64: 2, 128>}]} {
    %c0 = arith.constant 0 : index
    %c0_0 = arith.constant 0 : index
    %c0_1 = arith.constant 0 : index
    %0 = vector.load %arg1[%c0, %c0_0, %c0_1] : memref<2x4x256xf32, #tpu.memory_space<vmem>>, vector<2x4x256xf32>
    %cst = arith.constant dense<0.000000e+00> : vector<2x4xf32>
    %1 = vector.multi_reduction <add>, %0, %cst [2] : vector<2x4x256xf32> to vector<2x4xf32>
    %c0_2 = arith.constant 0 : index
    %c0_3 = arith.constant 0 : index
    %2 = vector.load %arg2[%c0_2, %c0_3] : memref<128x4xf32, #tpu.memory_space<vmem>>, vector<128x4xf32>
    %cst_4 = arith.constant dense<0.000000e+00> : vector<2x128xf32>
    %3 = tpu.matmul %1, %2, %cst_4 {dimension_numbers = #tpu.dot_dimension_numbers<[1], [1], [0], [0], [0, 0, 1, 0], [], []>} : vector<2x4xf32>, vector<128x4xf32>, vector<2x128xf32> -> vector<2x128xf32>
    %c0_5 = arith.constant 0 : index
    %c0_6 = arith.constant 0 : index
    %4 = vector.load %arg3[%c0_5, %c0_6] : memref<1x128xf32, #tpu.memory_space<vmem>>, vector<1x128xf32>
    %5 = vector.broadcast %4 : vector<1x128xf32> to vector<2x128xf32>
    %6 = arith.addf %3, %5 : vector<2x128xf32>
    %c0_7 = arith.constant 0 : index
    %c0_8 = arith.constant 0 : index
    %7 = vector.load %arg5[%c0_7, %c0_8] : memref<2x128xf32, #tpu.memory_space<vmem>>, vector<2x128xf32>
    tpu.vector_store %arg5[%c0_7, %c0_8], %6 {strides = array<i32>} : memref<2x128xf32, #tpu.memory_space<vmem>>, vector<2x128xf32>,
    %cst_9 = arith.constant dense<0xFF800000> : vector<2xf32>
    %8 = vector.multi_reduction <maximumf>, %6, %cst_9 [1] : vector<2x128xf32> to vector<2xf32>
    %9 = vector.shape_cast %8 : vector<2xf32> to vector<2x1xf32>
    %10 = vector.broadcast %9 : vector<2x1xf32> to vector<2x128xf32>
    %11 = arith.subf %6, %10 : vector<2x128xf32>
    %12 = math.exp %11 : vector<2x128xf32>
    %cst_10 = arith.constant dense<0.000000e+00> : vector<2xf32>
    %13 = vector.multi_reduction <add>, %12, %cst_10 [1] : vector<2x128xf32> to vector<2xf32>
    %14 = vector.shape_cast %13 : vector<2xf32> to vector<2x1xf32>
    %15 = math.log %14 : vector<2x1xf32>
    %16 = arith.addf %9, %15 : vector<2x1xf32>
    %17 = tpu.iota {dimensions = array<i32: 1>} : vector<2x128xi32>
    %c0_11 = arith.constant 0 : index
    %c0_12 = arith.constant 0 : index
    %18 = vector.load %arg4[%c0_11, %c0_12] : memref<2x1xi32, #tpu.memory_space<vmem>>, vector<2x1xi32>
    %19 = vector.broadcast %18 : vector<2x1xi32> to vector<2x128xi32>
    %20 = arith.cmpi eq, %17, %19 : vector<2x128xi32>
    %21 = arith.extui %20 : vector<2x128xi1> to vector<2x128xi32>
    %22 = arith.sitofp %21 : vector<2x128xi32> to vector<2x128xf32>
    %23 = arith.mulf %6, %22 : vector<2x128xf32>
    %cst_13 = arith.constant dense<0.000000e+00> : vector<2xf32>
    %24 = vector.multi_reduction <add>, %23, %cst_13 [1] : vector<2x128xf32> to vector<2xf32>
    %25 = vector.shape_cast %24 : vector<2xf32> to vector<2x1xf32>
    %26 = arith.subf %16, %25 : vector<2x1xf32>
    %27 = vector.shape_cast %26 : vector<2x1xf32> to vector<2x1xf32>
    %28 = vector.broadcast %27 : vector<2x1xf32> to vector<2x128xf32>
    %c0_14 = arith.constant 0 : index
    %c0_15 = arith.constant 0 : index
    %29 = vector.load %arg6[%c0_14, %c0_15] : memref<2x128xf32, #tpu.memory_space<vmem>>, vector<2x128xf32>
    tpu.vector_store %arg6[%c0_14, %c0_15], %28 {strides = array<i32>} : memref<2x128xf32, #tpu.memory_space<vmem>>, vector<2x128xf32>,
    return
  }
  func.func @transform_0(%arg0: i32) -> (i32, i32, i32) {
    %c0_i32 = arith.constant 0 : i32
    %c0_i32_0 = arith.constant 0 : i32
    %c0_i32_1 = arith.constant 0 : i32
    return %arg0, %c0_i32, %c0_i32_0 : i32, i32, i32
  }
  func.func @transform_1(%arg0: i32) -> (i32, i32) {
    %c0_i32 = arith.constant 0 : i32
    %c0_i32_0 = arith.constant 0 : i32
    %c0_i32_1 = arith.constant 0 : i32
    return %c0_i32, %c0_i32_0 : i32, i32
  }
  func.func @transform_2(%arg0: i32) -> (i32, i32) {
    %c0_i32 = arith.constant 0 : i32
    %c0_i32_0 = arith.constant 0 : i32
    %c0_i32_1 = arith.constant 0 : i32
    return %c0_i32, %c0_i32_0 : i32, i32
  }
  func.func @transform_3(%arg0: i32) -> (i32, i32) {
    %c0_i32 = arith.constant 0 : i32
    %c0_i32_0 = arith.constant 0 : i32
    return %arg0, %c0_i32 : i32, i32
  }
  func.func @transform_4(%arg0: i32) -> (i32, i32) {
    %c0_i32 = arith.constant 0 : i32
    %c0_i32_0 = arith.constant 0 : i32
    return %arg0, %c0_i32 : i32, i32
  }
  func.func @transform_5(%arg0: i32) -> (i32, i32) {
    %c0_i32 = arith.constant 0 : i32
    %c0_i32_0 = arith.constant 0 : i32
    return %arg0, %c0_i32 : i32, i32
  }
}

</mosaic_0001>

<llo_original>
// kernel: tpu_custom_call.1
$region0: #{tpu_custom_call.1}
  #allocation0 [shape = 'u32[]', space=smem, size = 0x4, offset = 0x4, fixed_abs, tag = 'smem constant byte address 0x4 - core index']
  #allocation1 [shape = 'u32[144,128]{1,0:T(1,128)}', space=vmem, size = 0x12000, scoped, tag = 'internal scratch']
  %s0 = inlined_call_operand.vmem [shape: f32[2,4,256], index: 0, kind: input, shape index: {}]
  %s1 = inlined_call_operand.vmem [shape: f32[128,4], index: 1, kind: input, shape index: {}]
  %s2 = inlined_call_operand.vmem [shape: f32[1,128], index: 2, kind: input, shape index: {}]
  %s3 = inlined_call_operand.vmem [shape: s32[2,1], index: 3, kind: input, shape index: {}]
  %s4 = inlined_call_operand.hbm [shape: f32[2,128], index: 4, kind: output, shape index: {0}]
  %s5 = inlined_call_operand.hbm [shape: f32[2,128], index: 5, kind: output, shape index: {1}]
  %6 = xla_tuple %s4, %s5
  %s7 = sld [smem:[#allocation0]]
  $region34: #{tpu_custom_call.1} parent=0
    _
  %s9 = ssub.s32 1, %s7
  %s10 = scalar_select 0, %s9, %s7
  $region1: #{tpu_custom_call.1} parent=0
    #allocation2 [shape = 'u8[1024]{0}', space=vmem, size = 0x400, scoped, tag = 'output window, operand 0, single buffered']
    #allocation3 [shape = 's32[1]{0}', space=sflag, size = 0x4, scoped, tag = 'scoped memory for tpu_custom_call.1']
    #allocation4 [shape = 'u8[1024]{0}', space=vmem, size = 0x400, scoped, tag = 'output window, operand 1, single buffered']
    #allocation5 [shape = 's32[1]{0}', space=sflag, size = 0x4, scoped, tag = 'scoped memory for tpu_custom_call.1']
    %11 = vsyncpa [#allocation3], 0
    %12 = vsyncpa [#allocation5], 0
    // Predicated region
    $region2: #{tpu_custom_call.1} parent=1 // pred_check
      _
    $region3: #{tpu_custom_call.1} parent=1 // pred_check_branch
      %14 = sbr.rel (0) target = $region5
    $region4: #{tpu_custom_call.1} parent=1 // pred_region
      _
    $region5: #{tpu_custom_call.1} parent=1 // pred_fallthru
      _
    // Predicated region
    $region6: #{tpu_custom_call.1} parent=1 // pred_check
      _
    $region7: #{tpu_custom_call.1} parent=1 // pred_check_branch
      %16 = sbr.rel (0) target = $region9
    $region8: #{tpu_custom_call.1} parent=1 // pred_region
      _
    $region9: #{tpu_custom_call.1} parent=1 // pred_fallthru
      _
    // Predicated region
    $region10: #{tpu_custom_call.1} parent=1 // pred_check
      _
    $region11: #{tpu_custom_call.1} parent=1 // pred_check_branch
      %18 = sbr.rel (0) target = $region13
    $region12: #{tpu_custom_call.1} parent=1 // pred_region
      _
    $region13: #{tpu_custom_call.1} parent=1 // pred_fallthru
      _
    // Predicated region
    $region14: #{tpu_custom_call.1} parent=1 // pred_check
      _
    $region15: #{tpu_custom_call.1} parent=1 // pred_check_branch
      %20 = sbr.rel (0) target = $region17
    $region16: #{tpu_custom_call.1} parent=1 // pred_region
      _
    $region17: #{tpu_custom_call.1} parent=1 // pred_fallthru
      _
    %v21 = vld [vmem:[%s0] sm:$0xff]
    %v22 = vld [vmem:[%s0 + $0x8] sm:$0xff]
    %v25 = vcombine.high %v21, %v21
    %v26 = vcombine.high %v22, %v22
    %vm29 = vcmask 1043456
    %v30 = vsel %vm29, %v21, 0.0
    %v31 = vsel %vm29, %v25, 0.0
    %v32 = vadd.f32 %v30, %v31
    %33 = vadd.xlane.f32.xlu0 %v32
    %v34 = vpop.xlane.xlu0 %33
    %v35 = vsel %vm29, %v22, 0.0
    %v36 = vsel %vm29, %v26, 0.0
    %v37 = vadd.f32 %v35, %v36
    %38 = vadd.xlane.f32.xlu0 %v37
    %v39 = vpop.xlane.xlu0 %38
    %v40 = vld [vmem:[%s1] sm:$0xff]
    %v41 = vld [vmem:[%s1 + $0x8] sm:$0xff]
    %v42 = vld [vmem:[%s1 + $0x10] sm:$0xff]
    %v43 = vld [vmem:[%s1 + $0x18] sm:$0xff]
    %v44 = vld [vmem:[%s1 + $0x20] sm:$0xff]
    %v45 = vld [vmem:[%s1 + $0x28] sm:$0xff]
    %v46 = vld [vmem:[%s1 + $0x30] sm:$0xff]
    %v47 = vld [vmem:[%s1 + $0x38] sm:$0xff]
    %v48 = vld [vmem:[%s1 + $0x40] sm:$0xff]
    %v49 = vld [vmem:[%s1 + $0x48] sm:$0xff]
    %v50 = vld [vmem:[%s1 + $0x50] sm:$0xff]
    %v51 = vld [vmem:[%s1 + $0x58] sm:$0xff]
    %v52 = vld [vmem:[%s1 + $0x60] sm:$0xff]
    %v53 = vld [vmem:[%s1 + $0x68] sm:$0xff]
    %v54 = vld [vmem:[%s1 + $0x70] sm:$0xff]
    %v55 = vld [vmem:[%s1 + $0x78] sm:$0xff]
    %v56 = vld [vmem:[%s2] sm:$0x1]
    %v58 = vlaneseq
    %v59 = vshrl.u32 %v58, 7
    %v60 = vsub.s32 0, %v59
    %v61 = vrot.slane %v56, %v60
    %v65 = vlaneseq
    %v66 = vand.u32 %v65, 127
    %v67 = vlaneseq
    %v68 = vshrl.u32 %v67, 7
    %v69 = vsub.s32 %v66, %v68
    %v70 = vrot.slane %v34, %v69
    %v71 = vlaneseq
    %v72 = vshrl.u32 %v71, 7
    %v73 = vsub.s32 %v66, %v72
    %v74 = vrot.slane %v39, %v73
    %vm75 = vcmask 1041409
    %v76 = vsel %vm75, %v74, %v70
    %vm77 = vcmask 31744
    %v78 = vsel %vm77, %v76, 0
    %v81 = vsel %vm77, %v40, 0
    %v84 = vsel %vm77, %v41, 0
    %v87 = vsel %vm77, %v42, 0
    %v90 = vsel %vm77, %v43, 0
    %v93 = vsel %vm77, %v44, 0
    %v96 = vsel %vm77, %v45, 0
    %v99 = vsel %vm77, %v46, 0
    %v102 = vsel %vm77, %v47, 0
    %v105 = vsel %vm77, %v48, 0
    %v108 = vsel %vm77, %v49, 0
    %v111 = vsel %vm77, %v50, 0
    %v114 = vsel %vm77, %v51, 0
    %v117 = vsel %vm77, %v52, 0
    %v120 = vsel %vm77, %v53, 0
    %v123 = vsel %vm77, %v54, 0
    %v126 = vsel %vm77, %v55, 0
    %128 = vmatprep.subr.mxu0 0.0
    %129 = vmatpush1.xpose.msra.mxu0 %v126
    %130 = vmatprep.subr.mxu0 0.0
    %131 = vmatpush1.xpose.msra.mxu0 %v123
    %132 = vmatprep.subr.mxu0 0.0
    %133 = vmatpush1.xpose.msra.mxu0 %v120
    %134 = vmatprep.subr.mxu0 0.0
    %135 = vmatpush1.xpose.msra.mxu0 %v117
    %136 = vmatprep.subr.mxu0 0.0
    %137 = vmatpush1.xpose.msra.mxu0 %v114
    %138 = vmatprep.subr.mxu0 0.0
    %139 = vmatpush1.xpose.msra.mxu0 %v111
    %140 = vmatprep.subr.mxu0 0.0
    %141 = vmatpush1.xpose.msra.mxu0 %v108
    %142 = vmatprep.subr.mxu0 0.0
    %143 = vmatpush1.xpose.msra.mxu0 %v105
    %144 = vmatprep.subr.mxu0 0.0
    %145 = vmatpush1.xpose.msra.mxu0 %v102
    %146 = vmatprep.subr.mxu0 0.0
    %147 = vmatpush1.xpose.msra.mxu0 %v99
    %148 = vmatprep.subr.mxu0 0.0
    %149 = vmatpush1.xpose.msra.mxu0 %v96
    %150 = vmatprep.subr.mxu0 0.0
    %151 = vmatpush1.xpose.msra.mxu0 %v93
    %152 = vmatprep.subr.mxu0 0.0
    %153 = vmatpush1.xpose.msra.mxu0 %v90
    %154 = vmatprep.subr.mxu0 0.0
    %155 = vmatpush1.xpose.msra.mxu0 %v87
    %156 = vmatprep.subr.mxu0 0.0
    %157 = vmatpush1.xpose.msra.mxu0 %v84
    %158 = vmatprep.subr.mxu0 0.0
    %159 = vmatpush1.xpose.msra.mxu0 %v81
    %160 = vmatprep.subr.mxu0 0.0
    %161 = vmatpush2.xpose.msra.mxu0 0.0
    %162 = vmatprep.subr.mxu0 0.0
    %163 = vmatpush2.xpose.msra.mxu0 0.0
    %164 = vmatprep.subr.mxu0 0.0
    %165 = vmatpush2.xpose.msra.mxu0 0.0
    %166 = vmatprep.subr.mxu0 0.0
    %167 = vmatpush2.xpose.msra.mxu0 0.0
    %168 = vmatprep.subr.mxu0 0.0
    %169 = vmatpush2.xpose.msra.mxu0 0.0
    %170 = vmatprep.subr.mxu0 0.0
    %171 = vmatpush2.xpose.msra.mxu0 0.0
    %172 = vmatprep.subr.mxu0 0.0
    %173 = vmatpush2.xpose.msra.mxu0 0.0
    %174 = vmatprep.subr.mxu0 0.0
    %175 = vmatpush2.xpose.msra.mxu0 0.0
    %176 = vmatprep.subr.mxu0 0.0
    %177 = vmatpush2.xpose.msra.mxu0 0.0
    %178 = vmatprep.subr.mxu0 0.0
    %179 = vmatpush2.xpose.msra.mxu0 0.0
    %180 = vmatprep.subr.mxu0 0.0
    %181 = vmatpush2.xpose.msra.mxu0 0.0
    %182 = vmatprep.subr.mxu0 0.0
    %183 = vmatpush2.xpose.msra.mxu0 0.0
    %184 = vmatprep.subr.mxu0 0.0
    %185 = vmatpush2.xpose.msra.mxu0 0.0
    %186 = vmatprep.subr.mxu0 0.0
    %187 = vmatpush2.xpose.msra.mxu0 0.0
    %188 = vmatprep.subr.mxu0 0.0
    %189 = vmatpush2.xpose.msra.mxu0 0.0
    %190 = vmatprep.subr.mxu0 0.0
    %191 = vmatpush2.xpose.msra.mxu0 0.0
    %192 = vmatprep.mubr.f32.mxu0 0.0
    %193 = vmatmul.mubr.f32.gmra.mxu0 %v78
    %v194 = vpop.f32.mrf.mxu0
    %v195 = vadd.f32 %v61, %v194
    %v196 = vpop.f32.mrf.mxu0
    %197 = vdwg.mxu0
    %198 = vst [vmem:[#allocation2] sm:$0x3] %v195
    %vm199 = vcmask 1041408
    %v200 = vsel %vm199, %v195, -inf
    %201 = vmax.xlane.f32.xlu0 %v200
    %v202 = vpop.xlane.xlu0 %201
    %v203 = vsub.f32 %v195, %v202
    %v204 = vmul.f32 %v203, 1.442695
    %v205 = vpow.pop %v204
    %v206 = vsel %vm199, %v205, 0.0
    %207 = vadd.xlane.f32.xlu0 %v206
    %v208 = vpop.xlane.xlu0 %207
    %v209 = vlog2.pop %v208
    %v210 = vmul.f32 %v209, 0.6931472
    %v211 = vadd.f32 %v202, %v210
    %v212 = vld [vmem:[%s3] sm:$0x3]
    %213 = vset.pattern.permute.xlu0 0
    %214 = vperm.xlu0 %213, %v212
    %v215 = vpop.permute.xlu0 %214
    %vm216 = vcmp.eq.s32.totalorder %v66, %v215
    %v217 = vsel %vm216, 1, 0
    %v218 = vcvt.s32.f32 %v217
    %v219 = vmul.f32 %v195, %v218
    %v220 = vsel %vm199, %v219, 0.0
    %221 = vadd.xlane.f32.xlu0 %v220
    %v222 = vpop.xlane.xlu0 %221
    %v223 = vsub.f32 %v211, %v222
    %224 = vst [vmem:[#allocation4] sm:$0x3] %v223
    // Predicated region
    $region18: #{tpu_custom_call.1} parent=1 // pred_check
      _
    $region19: #{tpu_custom_call.1} parent=1 // pred_check_branch
      %226 = sbr.rel (0) target = $region21
    $region20: #{tpu_custom_call.1} parent=1 // pred_region
      %s228 = ssub.s32 32, 32
      %229 = vsyncadd [#allocation3], %s228
      %s231 = sshll.u32 [#allocation2], 4
      %s232 = int_to_ptr.vmem [resolvable:$true] %s231
      %234 = dma.vmem_to_hbm [thread:$0]  %s232, 32, %s4, [#allocation3]
    $region21: #{tpu_custom_call.1} parent=1 // pred_fallthru
      _
    // Predicated region
    $region22: #{tpu_custom_call.1} parent=1 // pred_check
      _
    $region23: #{tpu_custom_call.1} parent=1 // pred_check_branch
      %236 = sbr.rel (0) target = $region25
    $region24: #{tpu_custom_call.1} parent=1 // pred_region
      %s238 = ssub.s32 32, 32
      %239 = vsyncadd [#allocation5], %s238
      %s241 = sshll.u32 [#allocation4], 4
      %s242 = int_to_ptr.vmem [resolvable:$true] %s241
      %244 = dma.vmem_to_hbm [thread:$0]  %s242, 32, %s5, [#allocation5]
    $region25: #{tpu_custom_call.1} parent=1 // pred_fallthru
      _
    // Predicated region
    $region26: #{tpu_custom_call.1} parent=1 // pred_check
      _
    $region27: #{tpu_custom_call.1} parent=1 // pred_check_branch
      %246 = sbr.rel (0) target = $region29
    $region28: #{tpu_custom_call.1} parent=1 // pred_region
      %247 = dma.done [#allocation3], 32
    $region29: #{tpu_custom_call.1} parent=1 // pred_fallthru
      _
    // Predicated region
    $region30: #{tpu_custom_call.1} parent=1 // pred_check
      _
    $region31: #{tpu_custom_call.1} parent=1 // pred_check_branch
      %249 = sbr.rel (0) target = $region33
    $region32: #{tpu_custom_call.1} parent=1 // pred_region
      %250 = dma.done [#allocation5], 32
    $region33: #{tpu_custom_call.1} parent=1 // pred_fallthru
      _
    %251 = vsyncpa [#allocation3], 1
    %252 = vsyncpa [#allocation5], 1

</llo_original>
